<compile_context>
chip_gen: v6e
topology: v6e:2x2x1
jax: 0.10.0
libtpu: 0.0.40
codegen_flags: <defaults>
</compile_context>

<pallas_src>
import functools

import jax
import jax.numpy as jnp
from jax.experimental import pallas as pl
from jax.experimental.pallas import tpu as pltpu

F_IN = 2      # nn.Linear(2, 2)
LANES = 128   # TPU vreg lane width


def _affine_kernel(wb_ref, x_ref, o_ref):
    """Linear(2, 2) on a feature-major, lane-dense tile.

    wb_ref : SMEM (6,) f32 = [w00, w01, w10, w11, b0, b1]  (PyTorch W is (out, in))
    x_ref  : VMEM (2, SB, 128) with x_ref[f, j, l] = x[j*128 + l, f]
    o_ref  : VMEM (2, SB, 128), same layout for y
    """
    x0 = x_ref[0].astype(jnp.float32)          # (SB, 128), fully dense vregs
    x1 = x_ref[1].astype(jnp.float32)
    w00 = wb_ref[0]
    w01 = wb_ref[1]
    w10 = wb_ref[2]
    w11 = wb_ref[3]
    b0 = wb_ref[4]
    b1 = wb_ref[5]
    o_ref[0] = (w00 * x0 + w01 * x1 + b0).astype(o_ref.dtype)
    o_ref[1] = (w10 * x0 + w11 * x1 + b1).astype(o_ref.dtype)


@functools.partial(jax.jit, static_argnames=("sb_max",))
def _pallas_forward(x, W, b, *, sb_max=1024):
    n, f = x.shape
    assert f == F_IN
    out_dtype = x.dtype

    # 6 scalars for SMEM: row-major W then bias.
    wb = jnp.concatenate(
        [W.astype(jnp.float32).reshape(-1), b.astype(jnp.float32).reshape(-1)])

    # Feature-major, lane-dense activations: (2, nb, 128).
    nb = pl.cdiv(n, LANES)              # number of 128-lane columns
    n_pad = nb * LANES
    xt = jnp.pad(x, ((0, n_pad - n), (0, 0))).T.reshape(F_IN, nb, LANES)

    # Tile the lane-column axis; full-extent block when the batch is small
    # (block dim equal to the full array dim is exempt from the 8/128 rule).
    sb = sb_max if nb >= sb_max else nb
    grid = (pl.cdiv(nb, sb),)

    out = pl.pallas_call(
        _affine_kernel,
        out_shape=jax.ShapeDtypeStruct((F_IN, nb, LANES), out_dtype),
        grid=grid,
        in_specs=[
            pl.BlockSpec(memory_space=pltpu.MemorySpace.SMEM),     # 6 scalars
            pl.BlockSpec((F_IN, sb, LANES), lambda i: (0, i, 0)),  # activations
        ],
        out_specs=pl.BlockSpec((F_IN, sb, LANES), lambda i: (0, i, 0)),
        compiler_params=pltpu.CompilerParams(
            dimension_semantics=("parallel",),
            allow_input_fusion=[False, True],   # fuse layout plumbing into input
            vmem_limit_bytes=32 * 1024 * 1024,
        ),
        cost_estimate=pl.CostEstimate(
            flops=8 * n, transcendentals=0, bytes_accessed=16 * n),
    )(wb, xt)

    # Back to the module's (N, 2) row-major layout; padded tail rows dropped.
    return out.reshape(F_IN, n_pad)[:, :n].T


@jax.jit
def _xla_forward(x, W, b):
    """Fused XLA affine — strictly faster than a custom call for tiny batches."""
    return (x @ W.T.astype(x.dtype) + b.astype(x.dtype)).astype(x.dtype)


def a_forward(x, W, b, *, force_pallas=False, small_n_threshold=4096, sb_max=1024):
    """A.forward(x) = Linear(2, 2).  x: (N, 2); W: (2, 2) PyTorch (out, in); b: (2,)."""
    n, f = x.shape
    assert f == F_IN
    if n < small_n_threshold and not force_pallas:
        return _xla_forward(x, W, b)
    return _pallas_forward(x, W, b, sb_max=sb_max)


def _ref_forward(x, W, b):
    """Pure-JAX reference of nn.Linear(2, 2).forward."""
    return x @ W.T + b


if __name__ == "__main__":
    key = jax.random.PRNGKey(0)
    k_w, k_b, k_x1, k_x2 = jax.random.split(key, 4)

    # Deterministic init mimicking nn.Linear's U(-1/sqrt(in), 1/sqrt(in)).
    bound = 1.0 / jnp.sqrt(jnp.float32(F_IN))
    W = jax.random.uniform(k_w, (F_IN, F_IN), jnp.float32, -bound, bound)  # (out, in)
    b = jax.random.uniform(k_b, (F_IN,), jnp.float32, -bound, bound)

    ok = True

    # Small, module-consistent batch, forced through the Pallas kernel.
    x_small = jax.random.normal(k_x1, (8, F_IN), jnp.float32)
    y_small = jax.block_until_ready(a_forward(x_small, W, b, force_pallas=True))
    ok &= y_small.shape == (8, F_IN)
    ok &= bool(jnp.allclose(y_small, _ref_forward(x_small, W, b), atol=1e-5, rtol=1e-5))

    # Batch not a multiple of 128: exercises padding + masked partial block.
    x_odd = jax.random.normal(k_x2, (333, F_IN), jnp.float32)
    y_odd = jax.block_until_ready(a_forward(x_odd, W, b, force_pallas=True))
    ok &= y_odd.shape == (333, F_IN)
    ok &= bool(jnp.allclose(y_odd, _ref_forward(x_odd, W, b), atol=1e-5, rtol=1e-5))

    # Default dispatch: tiny batches take the fused-XLA bypass.
    y_bypass = jax.block_until_ready(a_forward(x_small, W, b))
    ok &= bool(jnp.allclose(y_bypass, _ref_forward(x_small, W, b), atol=1e-5, rtol=1e-5))

    if ok:
        print("KERNEL_OK")
</pallas_src>

<mosaic_0001>
module attributes {stable_mosaic.version = 11 : i64} {
  func.func @_affine_kernel(%arg0: i32, %arg1: memref<6xf32, #tpu.memory_space<smem>>, %arg2: memref<2x1x128xf32, #tpu.memory_space<vmem>>, %arg3: memref<2x1x128xf32, #tpu.memory_space<vmem>>) attributes {dimension_semantics = [#tpu.dimension_semantics<parallel>], iteration_bounds = array<i64: 1>, scalar_prefetch = 0 : i64, scratch_operands = 0 : i64, tpu.core_type = #tpu.core_type<tc>, window_params = [{transform_indices = @transform_0, window_bounds = array<i64: 6>}, {transform_indices = @transform_1, window_bounds = array<i64: 2, 1, 128>}, {transform_indices = @transform_2, window_bounds = array<i64: 2, 1, 128>}]} {
    %c0 = arith.constant 0 : index
    %c0_0 = arith.constant 0 : index
    %c0_1 = arith.constant 0 : index
    %0 = vector.load %arg2[%c0, %c0_0, %c0_1] : memref<2x1x128xf32, #tpu.memory_space<vmem>>, vector<1x1x128xf32>
    %1 = vector.shape_cast %0 : vector<1x1x128xf32> to vector<1x128xf32>
    %c1 = arith.constant 1 : index
    %c0_2 = arith.constant 0 : index
    %c0_3 = arith.constant 0 : index
    %2 = vector.load %arg2[%c1, %c0_2, %c0_3] : memref<2x1x128xf32, #tpu.memory_space<vmem>>, vector<1x1x128xf32>
    %3 = vector.shape_cast %2 : vector<1x1x128xf32> to vector<1x128xf32>
    %c0_4 = arith.constant 0 : index
    %4 = memref.load %arg1[%c0_4] : memref<6xf32, #tpu.memory_space<smem>>
    %c1_5 = arith.constant 1 : index
    %5 = memref.load %arg1[%c1_5] : memref<6xf32, #tpu.memory_space<smem>>
    %c2 = arith.constant 2 : index
    %6 = memref.load %arg1[%c2] : memref<6xf32, #tpu.memory_space<smem>>
    %c3 = arith.constant 3 : index
    %7 = memref.load %arg1[%c3] : memref<6xf32, #tpu.memory_space<smem>>
    %c4 = arith.constant 4 : index
    %8 = memref.load %arg1[%c4] : memref<6xf32, #tpu.memory_space<smem>>
    %c5 = arith.constant 5 : index
    %9 = memref.load %arg1[%c5] : memref<6xf32, #tpu.memory_space<smem>>
    %10 = vector.broadcast %4 : f32 to vector<1x128xf32>
    %11 = arith.mulf %10, %1 : vector<1x128xf32>
    %12 = vector.broadcast %5 : f32 to vector<1x128xf32>
    %13 = arith.mulf %12, %3 : vector<1x128xf32>
    %14 = arith.addf %11, %13 : vector<1x128xf32>
    %15 = vector.broadcast %8 : f32 to vector<1x128xf32>
    %16 = arith.addf %14, %15 : vector<1x128xf32>
    %c0_6 = arith.constant 0 : index
    %c0_7 = arith.constant 0 : index
    %c0_8 = arith.constant 0 : index
    %17 = vector.load %arg3[%c0_6, %c0_7, %c0_8] : memref<2x1x128xf32, #tpu.memory_space<vmem>>, vector<1x1x128xf32>
    %18 = vector.shape_cast %17 : vector<1x1x128xf32> to vector<1x128xf32>
    %19 = vector.shape_cast %16 : vector<1x128xf32> to vector<1x1x128xf32>
    tpu.vector_store %arg3[%c0_6, %c0_7, %c0_8], %19 {strides = array<i32>} : memref<2x1x128xf32, #tpu.memory_space<vmem>>, vector<1x1x128xf32>,
    %20 = vector.broadcast %6 : f32 to vector<1x128xf32>
    %21 = arith.mulf %20, %1 : vector<1x128xf32>
    %22 = vector.broadcast %7 : f32 to vector<1x128xf32>
    %23 = arith.mulf %22, %3 : vector<1x128xf32>
    %24 = arith.addf %21, %23 : vector<1x128xf32>
    %25 = vector.broadcast %9 : f32 to vector<1x128xf32>
    %26 = arith.addf %24, %25 : vector<1x128xf32>
    %c1_9 = arith.constant 1 : index
    %c0_10 = arith.constant 0 : index
    %c0_11 = arith.constant 0 : index
    %27 = vector.load %arg3[%c1_9, %c0_10, %c0_11] : memref<2x1x128xf32, #tpu.memory_space<vmem>>, vector<1x1x128xf32>
    %28 = vector.shape_cast %27 : vector<1x1x128xf32> to vector<1x128xf32>
    %29 = vector.shape_cast %26 : vector<1x128xf32> to vector<1x1x128xf32>
    tpu.vector_store %arg3[%c1_9, %c0_10, %c0_11], %29 {strides = array<i32>} : memref<2x1x128xf32, #tpu.memory_space<vmem>>, vector<1x1x128xf32>,
    return
  }
  func.func @transform_0(%arg0: i32) -> i32 {
    %c0_i32 = arith.constant 0 : i32
    %c0_i32_0 = arith.constant 0 : i32
    return %c0_i32 : i32
  }
  func.func @transform_1(%arg0: i32) -> (i32, i32, i32) {
    %c0_i32 = arith.constant 0 : i32
    %c0_i32_0 = arith.constant 0 : i32
    %c0_i32_1 = arith.constant 0 : i32
    return %c0_i32, %arg0, %c0_i32_0 : i32, i32, i32
  }
  func.func @transform_2(%arg0: i32) -> (i32, i32, i32) {
    %c0_i32 = arith.constant 0 : i32
    %c0_i32_0 = arith.constant 0 : i32
    %c0_i32_1 = arith.constant 0 : i32
    return %c0_i32, %arg0, %c0_i32_0 : i32, i32, i32
  }
}

</mosaic_0001>

<llo_original>
// kernel: _pallas_forward.1
$region0: #{_pallas_forward.1}
  #allocation0 [shape = 'u32[]', space=smem, size = 0x4, offset = 0x4, fixed_abs, tag = 'smem constant byte address 0x4 - core index']
  #allocation1 [shape = 'u32[144,128]{1,0:T(1,128)}', space=vmem, size = 0x12000, scoped, tag = 'internal scratch']
  %s0 = inlined_call_operand.vmem [shape: f32[6], index: 0, kind: input, shape index: {}]
  %s1 = inlined_call_operand.vmem [shape: f32[2,1,128], index: 1, kind: input, shape index: {}]
  %s2 = inlined_call_operand.vmem [shape: f32[2,1,128], index: 2, kind: output, shape index: {}]
  %s3 = sld [smem:[#allocation0]]
  $region22: #{_pallas_forward.1} parent=0
    _
  %s5 = ssub.s32 1, %s3
  %s6 = scalar_select 0, %s5, %s3
  $region1: #{_pallas_forward.1} parent=0
    #allocation2 [shape = 'u8[512]{0}', space=smem, size = 0x200, scoped, tag = 'input window, operand 0, single buffered']
    #allocation3 [shape = 's32[1]{0}', space=sflag, size = 0x4, scoped, tag = 'scoped memory for _pallas_forward.1']
    %7 = vsyncpa [#allocation3], 0
    // Predicated region
    $region2: #{_pallas_forward.1} parent=1 // pred_check
      _
    $region3: #{_pallas_forward.1} parent=1 // pred_check_branch
      %9 = sbr.rel (0) target = $region5
    $region4: #{_pallas_forward.1} parent=1 // pred_region
      %s11 = ssub.s32 16, 16
      %12 = vsyncadd [#allocation3], %s11
      %s14 = sshll.u32 %s0, 4
      %s15 = int_to_ptr.vmem [resolvable:$true] %s14
      %17 = dma.vmem_to_smem %s15, 16, [#allocation2], [#allocation3]
    $region5: #{_pallas_forward.1} parent=1 // pred_fallthru
      _
    // Predicated region
    $region6: #{_pallas_forward.1} parent=1 // pred_check
      _
    $region7: #{_pallas_forward.1} parent=1 // pred_check_branch
      %19 = sbr.rel (0) target = $region9
    $region8: #{_pallas_forward.1} parent=1 // pred_region
      _
    $region9: #{_pallas_forward.1} parent=1 // pred_fallthru
      _
    // Predicated region
    $region10: #{_pallas_forward.1} parent=1 // pred_check
      _
    $region11: #{_pallas_forward.1} parent=1 // pred_check_branch
      %21 = sbr.rel (0) target = $region13
    $region12: #{_pallas_forward.1} parent=1 // pred_region
      %22 = dma.done [#allocation3], 16
    $region13: #{_pallas_forward.1} parent=1 // pred_fallthru
      _
    %23 = sfence
    %v24 = vld [vmem:[%s1] sm:$0x1]
    %s25 = scalar_lea.vmem %s1, 1
    %v26 = vld [vmem:[%s25] sm:$0x1]
    %s27 = sld [smem:[#allocation2]]
    %s28 = sld [smem:[#allocation2 + $0x1]]
    %s29 = sld [smem:[#allocation2 + $0x2]]
    %s30 = sld [smem:[#allocation2 + $0x3]]
    %s31 = sld [smem:[#allocation2 + $0x4]]
    %s32 = sld [smem:[#allocation2 + $0x5]]
    %v33 = vstv %s27
    %v34 = vmul.f32 %v33, %v24
    %v35 = vstv %s28
    %v36 = vmul.f32 %v35, %v26
    %v37 = vadd.f32 %v34, %v36
    %v38 = vstv %s31
    %v39 = vadd.f32 %v37, %v38
    %40 = vst [vmem:[%s2] sm:$0x1] %v39
    %v41 = vstv %s29
    %v42 = vmul.f32 %v41, %v24
    %v43 = vstv %s30
    %v44 = vmul.f32 %v43, %v26
    %v45 = vadd.f32 %v42, %v44
    %v46 = vstv %s32
    %v47 = vadd.f32 %v45, %v46
    %s48 = scalar_lea.vmem %s2, 1
    %49 = vst [vmem:[%s48] sm:$0x1] %v47
    // Predicated region
    $region14: #{_pallas_forward.1} parent=1 // pred_check
      _
    $region15: #{_pallas_forward.1} parent=1 // pred_check_branch
      %51 = sbr.rel (0) target = $region17
    $region16: #{_pallas_forward.1} parent=1 // pred_region
      _
    $region17: #{_pallas_forward.1} parent=1 // pred_fallthru
      _
    // Predicated region
    $region18: #{_pallas_forward.1} parent=1 // pred_check
      _
    $region19: #{_pallas_forward.1} parent=1 // pred_check_branch
      %53 = sbr.rel (0) target = $region21
    $region20: #{_pallas_forward.1} parent=1 // pred_region
      _
    $region21: #{_pallas_forward.1} parent=1 // pred_fallthru
      _
    %54 = vsyncpa [#allocation3], 1

</llo_original>
